<compile_context>
chip_gen: v7x
topology: tpu7x:2x2x1
jax: 0.10.0
libtpu: 0.0.40
codegen_flags: <defaults>
</compile_context>

<pallas_src>
import math
import numpy as np
import jax
import jax.numpy as jnp
from jax.experimental import pallas as pl
from jax.experimental.pallas import tpu as pltpu


def _cdiv(a: int, b: int) -> int:
    return -(-a // b)


def _sublane_quantum(dtype) -> int:
    # f32 -> 8 rows/vreg, bf16 -> 16, int8/fp8 -> 32
    return {4: 8, 2: 16, 1: 32}.get(jnp.dtype(dtype).itemsize, 8)


def _wxb_kernel(params_ref, x_ref, o_ref):
    # params_ref: (2, L), constant index_map -> resident in VMEM across grid.
    #   row 0 = w tiled along lanes, row 1 = b tiled along lanes.
    # x_ref / o_ref: (tile_rows, L) lane-dense tiles (L multiple of 128).
    w = params_ref[0:1, :]
    b = params_ref[1:2, :]
    o_ref[...] = (w * x_ref[...] + b).astype(o_ref.dtype)


def mixed_trainable_parameters(
    x: jax.Array,
    w: jax.Array,
    b: jax.Array,
    *,
    small_input_threshold: int = 1 << 14,   # elements
    x_tile_budget_bytes: int = 4 << 20,     # ~4 MiB of x per grid step
) -> jax.Array:
    """Pallas equivalent of MixedTrainableParameters.forward: y = w * x + b."""
    feat = int(w.shape[0])
    assert x.shape[-1] == feat, "last dim of x must match parameter length"
    orig_shape = x.shape
    out_dtype = jnp.result_type(x.dtype, w.dtype, b.dtype)

    total = int(np.prod(orig_shape))
    # Small-input bypass: pallas_call would be pure fixed cost and block fusion.
    if total <= small_input_threshold:
        return (w * x + b).astype(out_dtype)

    # ---- Lane-dense repack --------------------------------------------------
    g = 128 // math.gcd(feat, 128)          # feat=10 -> g=64
    lane_width = g * feat                   # multiple of 128 (feat=10 -> 640)
    rows_packed = _cdiv(total, lane_width)

    x_itemsize = jnp.dtype(x.dtype).itemsize
    out_itemsize = jnp.dtype(out_dtype).itemsize
    sublane = max(_sublane_quantum(x.dtype), _sublane_quantum(out_dtype))

    # ---- Byte-budgeted row tiles ---------------------------------------------
    tile_rows = max(
        sublane,
        (x_tile_budget_bytes // (lane_width * x_itemsize)) // sublane * sublane,
    )
    # Never pad more than one tile past the real data.
    tile_rows = min(tile_rows, _cdiv(rows_packed, sublane) * sublane)
    # Keep at least 2 grid steps when there is enough work (v7x: 2 TCs; also
    # keeps the double-buffer pipeline non-degenerate).
    half_rows = (rows_packed // (2 * sublane)) * sublane
    if half_rows >= sublane:
        tile_rows = min(tile_rows, half_rows)

    rows_padded = _cdiv(rows_packed, tile_rows) * tile_rows
    grid = (rows_padded // tile_rows,)

    # ---- Pack inputs ----------------------------------------------------------
    x_flat = x.reshape(-1)
    pad = rows_padded * lane_width - total
    if pad:
        x_flat = jnp.pad(x_flat, (0, pad))
    x2d = x_flat.reshape(rows_padded, lane_width)

    params_dtype = jnp.result_type(w.dtype, b.dtype)
    params2d = jnp.stack(
        [jnp.tile(w.astype(params_dtype), g), jnp.tile(b.astype(params_dtype), g)],
        axis=0,
    )  # (2, lane_width)

    # ---- VMEM budget (v7x: 64 MiB physical; v5e: 16 MiB default scoped) ------
    x_tile_bytes = tile_rows * lane_width * x_itemsize
    out_tile_bytes = tile_rows * lane_width * out_itemsize
    params_bytes = 2 * lane_width * jnp.dtype(params_dtype).itemsize
    vmem_needed = 2 * (x_tile_bytes + out_tile_bytes) + 2 * params_bytes
    vmem_limit = int(min(60 << 20, max(16 << 20, vmem_needed * 3 // 2)))

    out2d = pl.pallas_call(
        _wxb_kernel,
        out_shape=jax.ShapeDtypeStruct((rows_padded, lane_width), out_dtype),
        grid_spec=pltpu.PrefetchScalarGridSpec(
            num_scalar_prefetch=0,
            grid=grid,
            in_specs=[
                # Fused params: constant index_map -> resident across grid steps.
                pl.BlockSpec((2, lane_width), lambda i: (0, 0)),
                # Activations: lane-dense row tiles.
                pl.BlockSpec((tile_rows, lane_width), lambda i: (i, 0)),
            ],
            out_specs=pl.BlockSpec((tile_rows, lane_width), lambda i: (i, 0)),
        ),
        compiler_params=pltpu.CompilerParams(
            dimension_semantics=("parallel",),
            vmem_limit_bytes=vmem_limit,
        ),
    )(params2d, x2d)

    return out2d.reshape(-1)[:total].reshape(orig_shape)


if __name__ == "__main__":
    key = jax.random.PRNGKey(0)
    k_x1, k_x2, k_w, k_b = jax.random.split(key, 4)

    w = jax.random.normal(k_w, (10,), dtype=jnp.float32)
    b = jax.random.normal(k_b, (10,), dtype=jnp.float32)

    # Small input matching the torchinfo test (batch=2, features=10) -> JAX bypass.
    x_small = jax.random.normal(k_x1, (2, 10), dtype=jnp.float32)
    y_small = jax.block_until_ready(mixed_trainable_parameters(x_small, w, b))
    np.testing.assert_allclose(
        np.asarray(y_small), np.asarray(w * x_small + b), rtol=1e-6, atol=1e-6
    )
    assert y_small.shape == x_small.shape

    # Larger, non-divisible row count -> exercises the Pallas path
    # (lane-dense repack, padding, multi-step pipelined grid).
    x_big = jax.random.normal(k_x2, (2050, 10), dtype=jnp.float32)
    y_big = jax.block_until_ready(mixed_trainable_parameters(x_big, w, b))
    np.testing.assert_allclose(
        np.asarray(y_big), np.asarray(w * x_big + b), rtol=1e-6, atol=1e-6
    )
    assert y_big.shape == x_big.shape

    print("KERNEL_OK")
</pallas_src>

<mosaic_0001>
module attributes {stable_mosaic.version = 11 : i64} {
  func.func @_wxb_kernel(%arg0: i32, %arg1: memref<2x640xf32, #tpu.memory_space<vmem>>, %arg2: memref<16x640xf32, #tpu.memory_space<vmem>>, %arg3: memref<16x640xf32, #tpu.memory_space<vmem>>) attributes {dimension_semantics = [#tpu.dimension_semantics<parallel>], iteration_bounds = array<i64: 3>, scalar_prefetch = 0 : i64, scratch_operands = 0 : i64, tpu.core_type = #tpu.core_type<tc>, window_params = [{pipeline_mode = #tpu.pipeline_mode<synchronous>, transform_indices = @transform_0, window_bounds = array<i64: 2, 640>}, {transform_indices = @transform_1, window_bounds = array<i64: 16, 640>}, {transform_indices = @transform_2, window_bounds = array<i64: 16, 640>}]} {
    %c0 = arith.constant 0 : index
    %c0_0 = arith.constant 0 : index
    %0 = vector.load %arg1[%c0, %c0_0] : memref<2x640xf32, #tpu.memory_space<vmem>>, vector<1x640xf32>
    %c1 = arith.constant 1 : index
    %c0_1 = arith.constant 0 : index
    %1 = vector.load %arg1[%c1, %c0_1] : memref<2x640xf32, #tpu.memory_space<vmem>>, vector<1x640xf32>
    %c0_2 = arith.constant 0 : index
    %c0_3 = arith.constant 0 : index
    %2 = vector.load %arg2[%c0_2, %c0_3] : memref<16x640xf32, #tpu.memory_space<vmem>>, vector<16x640xf32>
    %3 = vector.broadcast %0 : vector<1x640xf32> to vector<16x640xf32>
    %4 = arith.mulf %3, %2 : vector<16x640xf32>
    %5 = vector.broadcast %1 : vector<1x640xf32> to vector<16x640xf32>
    %6 = arith.addf %4, %5 : vector<16x640xf32>
    %c0_4 = arith.constant 0 : index
    %c0_5 = arith.constant 0 : index
    %7 = vector.load %arg3[%c0_4, %c0_5] : memref<16x640xf32, #tpu.memory_space<vmem>>, vector<16x640xf32>
    tpu.vector_store %arg3[%c0_4, %c0_5], %6 {strides = array<i32>} : memref<16x640xf32, #tpu.memory_space<vmem>>, vector<16x640xf32>,
    return
  }
  func.func @transform_0(%arg0: i32) -> (i32, i32) {
    %c0_i32 = arith.constant 0 : i32
    %c0_i32_0 = arith.constant 0 : i32
    %c0_i32_1 = arith.constant 0 : i32
    return %c0_i32, %c0_i32_0 : i32, i32
  }
  func.func @transform_1(%arg0: i32) -> (i32, i32) {
    %c0_i32 = arith.constant 0 : i32
    %c0_i32_0 = arith.constant 0 : i32
    return %arg0, %c0_i32 : i32, i32
  }
  func.func @transform_2(%arg0: i32) -> (i32, i32) {
    %c0_i32 = arith.constant 0 : i32
    %c0_i32_0 = arith.constant 0 : i32
    return %arg0, %c0_i32 : i32, i32
  }
}

</mosaic_0001>

<llo_original>
// kernel: tpu_custom_call.1
$region0: #{tpu_custom_call.1}
  #allocation0 [shape = 'u32[]', space=smem, size = 0x4, offset = 0x4, fixed_abs, tag = 'smem constant byte address 0x4 - core index']
  #allocation1 [shape = 'u32[144,128]{1,0:T(1,128)}', space=vmem, size = 0x12000, scoped, tag = 'internal scratch']
  %s0 = inlined_call_operand.hbm [shape: f32[2,640], index: 0, kind: input, shape index: {}]
  %s1 = inlined_call_operand.hbm [shape: f32[48,640], index: 1, kind: input, shape index: {}]
  %s2 = inlined_call_operand.hbm [shape: f32[48,640], index: 2, kind: output, shape index: {}]
  %s3 = sld [smem:[#allocation0]]
  $region49: #{tpu_custom_call.1} parent=0
    _
  %s5 = ssub.s32 1, %s3
  %s6 = scalar_select 0, %s5, %s3
  $region1: #{tpu_custom_call.1} parent=0
    #allocation2 [shape = 'u8[5120]{0}', space=vmem, size = 0x1400, scoped, tag = 'input window, operand 0, single buffered']
    #allocation3 [shape = 's32[2]{0}', space=sflag, size = 0x8, scoped, tag = 'scoped memory for tpu_custom_call.1']
    #allocation4 [shape = 's32[2]{0}', space=sflag, size = 0x8, scoped, tag = 'scoped memory for tpu_custom_call.1']
    #allocation5 [shape = 'u8[81920]{0}', space=vmem, size = 0x14000, scoped, tag = 'input window, operand 1']
    #allocation6 [shape = 's32[2]{0}', space=sflag, size = 0x8, scoped, tag = 'scoped memory for tpu_custom_call.1']
    #allocation7 [shape = 'u8[81920]{0}', space=vmem, size = 0x14000, scoped, tag = 'output window, operand 0']
    %7 = vsyncpa [#allocation3], 0
    %8 = vsyncpa [#allocation6], 0
    %s9 = scalar_lea.sflag [#allocation6], 1
    %10 = vsyncpa %s9, 0
    %11 = vsyncpa [#allocation4], 0
    %s12 = scalar_lea.sflag [#allocation4], 1
    %13 = vsyncpa %s12, 0
    loop: start=0, step=1, limit=5
    $region2: #{tpu_custom_call.1} parent=1 // loop_pre_header
      _
    $region3: #{tpu_custom_call.1} parent=1 // loop_header
      %s15 = sphi 0, %s19
      %p16 = scmp.ge.s32.totalorder %s15, 5
      %s23 = sphi 0, %s23
      %s25 = sphi 0, %s23
      %s26 = sphi 0, %s25
      %s40 = sphi 0, %s26
      %s46 = sphi 0, %s48
      %s49 = sphi 0, %s46
      %s50 = sphi 0, %s49
      %s66 = sphi 0, %s50
      %s72 = sphi 0, %s74
      %s75 = sphi 0, %s72
      %s76 = sphi 0, %s75
      %s92 = sphi 0, %s76
    $region4: #{tpu_custom_call.1} parent=1 // loop_header_branch
      %18 = sbr.rel (%p16) target = $region8
    $region5: #{tpu_custom_call.1} parent=1 // loop_body
      %s20 = ssub.s32 %s15, 1
      %s21 = ssub.s32 %s15, 2
      %s22 = sadd.s32 %s15, 1
      %s24 = sadd.s32 %s23, 1
      %p27 = scmp.eq.s32.totalorder %s15, 2
      %p28 = scmp.ne.s32.totalorder %s23, %s25
      %p29 = scmp.eq.s32.totalorder %s15, 0
      %p30 = por %p28, %p29
      %p31 = scmp.ne.s32.totalorder %s23, %s25
      %p32 = scmp.eq.s32.totalorder %s20, 2
      %p33 = por %p31, %p32
      %p34 = scmp.ne.s32.totalorder %s25, %s26
      %p35 = scmp.eq.s32.totalorder %s20, 0
      %p36 = por %p34, %p35
      %p37 = scmp.ne.s32.totalorder %s25, %s26
      %p38 = scmp.eq.s32.totalorder %s21, 2
      %p39 = por %p37, %p38
      %p41 = scmp.ne.s32.totalorder %s26, %s40
      %p42 = scmp.eq.s32.totalorder %s21, 0
      %p43 = por %p41, %p42
      %s44 = ssub.s32 %s15, %s22
      %p45 = scmp.eq.s32.totalorder %s44, 0
      %s47 = sadd.s32 %s46, 1
      %s48 = scalar_select %p45, %s46, %s47
      %p51 = pneg %p45
      %p52 = scmp.eq.s32.totalorder %s15, 2
      %p53 = por %p51, %p52
      %p54 = scmp.ne.s32.totalorder %s46, %s49
      %p55 = scmp.eq.s32.totalorder %s15, 0
      %p56 = por %p54, %p55
      %p57 = scmp.ne.s32.totalorder %s46, %s49
      %p58 = scmp.eq.s32.totalorder %s20, 2
      %p59 = por %p57, %p58
      %p60 = scmp.ne.s32.totalorder %s49, %s50
      %p61 = scmp.eq.s32.totalorder %s20, 0
      %p62 = por %p60, %p61
      %p63 = scmp.ne.s32.totalorder %s49, %s50
      %p64 = scmp.eq.s32.totalorder %s21, 2
      %p65 = por %p63, %p64
      %p67 = scmp.ne.s32.totalorder %s50, %s66
      %p68 = scmp.eq.s32.totalorder %s21, 0
      %p69 = por %p67, %p68
      %s70 = ssub.s32 %s15, %s22
      %p71 = scmp.eq.s32.totalorder %s70, 0
      %s73 = sadd.s32 %s72, 1
      %s74 = scalar_select %p71, %s72, %s73
      %p77 = pneg %p71
      %p78 = scmp.eq.s32.totalorder %s15, 2
      %p79 = por %p77, %p78
      %p80 = scmp.ne.s32.totalorder %s72, %s75
      %p81 = scmp.eq.s32.totalorder %s15, 0
      %p82 = por %p80, %p81
      %p83 = scmp.ne.s32.totalorder %s72, %s75
      %p84 = scmp.eq.s32.totalorder %s20, 2
      %p85 = por %p83, %p84
      %p86 = scmp.ne.s32.totalorder %s75, %s76
      %p87 = scmp.eq.s32.totalorder %s20, 0
      %p88 = por %p86, %p87
      %p89 = scmp.ne.s32.totalorder %s75, %s76
      %p90 = scmp.eq.s32.totalorder %s21, 2
      %p91 = por %p89, %p90
      %p93 = scmp.ne.s32.totalorder %s76, %s92
      %p94 = scmp.eq.s32.totalorder %s21, 0
      %p95 = por %p93, %p94
      %p96 = scmp.le.s32.totalorder 1, %s15
      %p97 = scmp.lt.s32.totalorder %s15, 4
      %p98 = pnand %p96, %p97
      %p99 = pneg %p98
      // Predicated region
      $region9: #{tpu_custom_call.1} parent=5 // pred_check
        _
      $region10: #{tpu_custom_call.1} parent=5 // pred_check_branch
        %101 = sbr.rel (%p98) target = $region12
      $region11: #{tpu_custom_call.1} parent=5 // pred_region
        %s102 = ssub.s32 %s15, 1
        // Predicated region
        $region13: #{tpu_custom_call.1} parent=11 // pred_check
          %p103 = pneg %p36
        $region14: #{tpu_custom_call.1} parent=11 // pred_check_branch
          %105 = sbr.rel (%p103) target = $region16
        $region15: #{tpu_custom_call.1} parent=11 // pred_region
          %s107 = ssub.s32 160, 160
          %108 = vsyncadd [#allocation3], %s107
          %s110 = sshll.u32 [#allocation2], 4
          %s111 = int_to_ptr.vmem [resolvable:$true] %s110
          %113 = dma.hbm_to_vmem [thread:$0]  %s0, 160, %s111, [#allocation3]
        $region16: #{tpu_custom_call.1} parent=11 // pred_fallthru
          _
      $region12: #{tpu_custom_call.1} parent=5 // pred_fallthru
        _
      %p114 = scmp.lt.s32.totalorder %s15, 3
      // Predicated region
      $region17: #{tpu_custom_call.1} parent=5 // pred_check
        %p115 = pneg %p114
      $region18: #{tpu_custom_call.1} parent=5 // pred_check_branch
        %117 = sbr.rel (%p115) target = $region20
      $region19: #{tpu_custom_call.1} parent=5 // pred_region
        // Predicated region
        $region21: #{tpu_custom_call.1} parent=19 // pred_check
          %p118 = pneg %p56
        $region22: #{tpu_custom_call.1} parent=19 // pred_check_branch
          %120 = sbr.rel (%p118) target = $region24
        $region23: #{tpu_custom_call.1} parent=19 // pred_region
          %s121 = sand.u32 %s46, 1
          %s122 = scalar_lea.sflag [#allocation6], %s121
          %s123 = sand.u32 %s46, 1
          %s124 = smul.addr %s123, 80
          %s125 = scalar_lea.vmem [#allocation5], %s124
          %s126 = smul.u32 2, %s15
          %s128 = ssub.s32 1280, 1280
          %129 = vsyncadd %s122, %s128
          %s130 = smul.addr %s126, 5
          %s131 = smul.addr %s130, 128
          %s132 = scalar_lea.hbm %s1, %s131
          %s133 = sshll.u32 %s125, 4
          %s134 = int_to_ptr.vmem [resolvable:$true] %s133
          %139 = dma.hbm_to_vmem [thread:$0]  %s132, 1280, %s134, %s122, 640, 640, 40
        $region24: #{tpu_custom_call.1} parent=19 // pred_fallthru
          _
      $region20: #{tpu_custom_call.1} parent=5 // pred_fallthru
        _
      %p140 = scmp.le.s32.totalorder 1, %s15
      %p141 = scmp.lt.s32.totalorder %s15, 4
      %p142 = pnand %p140, %p141
      %p143 = pneg %p142
      // Predicated region
      $region25: #{tpu_custom_call.1} parent=5 // pred_check
        _
      $region26: #{tpu_custom_call.1} parent=5 // pred_check_branch
        %145 = sbr.rel (%p142) target = $region28
      $region27: #{tpu_custom_call.1} parent=5 // pred_region
        %s146 = ssub.s32 %s15, 1
        // Predicated region
        $region29: #{tpu_custom_call.1} parent=27 // pred_check
          %p147 = pneg %p36
        $region30: #{tpu_custom_call.1} parent=27 // pred_check_branch
          %149 = sbr.rel (%p147) target = $region32
        $region31: #{tpu_custom_call.1} parent=27 // pred_region
          %150 = dma.done [#allocation3], 160
        $region32: #{tpu_custom_call.1} parent=27 // pred_fallthru
          _
        %s151 = sand.u32 %s49, 1
        %s152 = scalar_lea.sflag [#allocation6], %s151
        %s153 = sand.u32 %s49, 1
        %s154 = smul.addr %s153, 80
        %s155 = scalar_lea.vmem [#allocation5], %s154
        // Predicated region
        $region33: #{tpu_custom_call.1} parent=27 // pred_check
          %p156 = pneg %p62
        $region34: #{tpu_custom_call.1} parent=27 // pred_check_branch
          %158 = sbr.rel (%p156) target = $region36
        $region35: #{tpu_custom_call.1} parent=27 // pred_region
          %159 = dma.done %s152, 1280
        $region36: #{tpu_custom_call.1} parent=27 // pred_fallthru
          _
        %p160 = pneg %p36
        %p161 = pneg %p33
        %s162 = sand.u32 %s49, 1
        %s163 = scalar_lea.sflag [#allocation6], %s162
        %s164 = sand.u32 %s49, 1
        %s165 = smul.addr %s164, 80
        %s166 = scalar_lea.vmem [#allocation5], %s165
        %p167 = pneg %p62
        %p168 = pneg %p59
        %p169 = pneg %p88
        %p170 = pneg %p85
        %s171 = sand.u32 %s75, 1
        %s172 = scalar_lea.sflag [#allocation4], %s171
        %s173 = sand.u32 %s75, 1
        %s174 = smul.addr %s173, 80
        %s175 = scalar_lea.vmem [#allocation7], %s174
        %s176 = smul.u32 2, %s20
        %s177 = smul.u32 2, %s20
        %v178 = vld [vmem:[#allocation2] ss:$2 sm:$0x1f]
        %s179 = scalar_lea.vmem [#allocation2], 1
        %v180 = vld [vmem:[%s179] ss:$2 sm:$0x1f]
        %v181 = vld [vmem:[%s155] sm:$0xff]
        %v182 = vld [vmem:[%s155 + $0x8] sm:$0xff]
        %v183 = vld [vmem:[%s155 + $0x10] sm:$0xff]
        %v184 = vld [vmem:[%s155 + $0x18] sm:$0xff]
        %v185 = vld [vmem:[%s155 + $0x20] sm:$0xff]
        %v186 = vld [vmem:[%s155 + $0x28] sm:$0xff]
        %v187 = vld [vmem:[%s155 + $0x30] sm:$0xff]
        %v188 = vld [vmem:[%s155 + $0x38] sm:$0xff]
        %v189 = vld [vmem:[%s155 + $0x40] sm:$0xff]
        %v190 = vld [vmem:[%s155 + $0x48] sm:$0xff]
        %v192 = vlaneseq
        %v193 = vshrl.u32 %v192, 7
        %v194 = vsub.s32 0, %v193
        %v195 = vrot.slane %v178, %v194
        %v196 = vlaneseq
        %v197 = vshrl.u32 %v196, 7
        %v198 = vsub.s32 1, %v197
        %v199 = vrot.slane %v178, %v198
        %v200 = vlaneseq
        %v201 = vshrl.u32 %v200, 7
        %v202 = vsub.s32 2, %v201
        %v203 = vrot.slane %v178, %v202
        %v204 = vlaneseq
        %v205 = vshrl.u32 %v204, 7
        %v206 = vsub.s32 3, %v205
        %v207 = vrot.slane %v178, %v206
        %v208 = vlaneseq
        %v209 = vshrl.u32 %v208, 7
        %v210 = vsub.s32 4, %v209
        %v211 = vrot.slane %v178, %v210
        %v217 = vmul.f32 %v195, %v181
        %v218 = vmul.f32 %v199, %v182
        %v219 = vmul.f32 %v203, %v183
        %v220 = vmul.f32 %v207, %v184
        %v221 = vmul.f32 %v211, %v185
        %v222 = vmul.f32 %v195, %v186
        %v223 = vmul.f32 %v199, %v187
        %v224 = vmul.f32 %v203, %v188
        %v225 = vmul.f32 %v207, %v189
        %v226 = vmul.f32 %v211, %v190
        %v228 = vlaneseq
        %v229 = vshrl.u32 %v228, 7
        %v230 = vsub.s32 0, %v229
        %v231 = vrot.slane %v180, %v230
        %v232 = vlaneseq
        %v233 = vshrl.u32 %v232, 7
        %v234 = vsub.s32 1, %v233
        %v235 = vrot.slane %v180, %v234
        %v236 = vlaneseq
        %v237 = vshrl.u32 %v236, 7
        %v238 = vsub.s32 2, %v237
        %v239 = vrot.slane %v180, %v238
        %v240 = vlaneseq
        %v241 = vshrl.u32 %v240, 7
        %v242 = vsub.s32 3, %v241
        %v243 = vrot.slane %v180, %v242
        %v244 = vlaneseq
        %v245 = vshrl.u32 %v244, 7
        %v246 = vsub.s32 4, %v245
        %v247 = vrot.slane %v180, %v246
        %v253 = vadd.f32 %v217, %v231
        %v254 = vadd.f32 %v218, %v235
        %v255 = vadd.f32 %v219, %v239
        %v256 = vadd.f32 %v220, %v243
        %v257 = vadd.f32 %v221, %v247
        %v258 = vadd.f32 %v222, %v231
        %v259 = vadd.f32 %v223, %v235
        %v260 = vadd.f32 %v224, %v239
        %v261 = vadd.f32 %v225, %v243
        %v262 = vadd.f32 %v226, %v247
        %263 = vst [vmem:[%s175] sm:$0xff] %v253
        %264 = vst [vmem:[%s175 + $0x8] sm:$0xff] %v254
        %265 = vst [vmem:[%s175 + $0x10] sm:$0xff] %v255
        %266 = vst [vmem:[%s175 + $0x18] sm:$0xff] %v256
        %267 = vst [vmem:[%s175 + $0x20] sm:$0xff] %v257
        %268 = vst [vmem:[%s175 + $0x28] sm:$0xff] %v258
        %269 = vst [vmem:[%s175 + $0x30] sm:$0xff] %v259
        %270 = vst [vmem:[%s175 + $0x38] sm:$0xff] %v260
        %271 = vst [vmem:[%s175 + $0x40] sm:$0xff] %v261
        %272 = vst [vmem:[%s175 + $0x48] sm:$0xff] %v262
        %s273 = sand.u32 %s75, 1
        %s274 = scalar_lea.sflag [#allocation4], %s273
        %s275 = sand.u32 %s75, 1
        %s276 = smul.addr %s275, 80
        %s277 = scalar_lea.vmem [#allocation7], %s276
        // Predicated region
        $region37: #{tpu_custom_call.1} parent=27 // pred_check
          %p278 = pneg %p85
        $region38: #{tpu_custom_call.1} parent=27 // pred_check_branch
          %280 = sbr.rel (%p278) target = $region40
        $region39: #{tpu_custom_call.1} parent=27 // pred_region
          %s281 = smul.u32 2, %s20
          %s283 = ssub.s32 1280, 1280
          %284 = vsyncadd %s274, %s283
          %s285 = smul.addr %s281, 5
          %s286 = smul.addr %s285, 128
          %s287 = scalar_lea.hbm %s2, %s286
          %s288 = sshll.u32 %s277, 4
          %s289 = int_to_ptr.vmem [resolvable:$true] %s288
          %294 = dma.vmem_to_hbm [thread:$0]  %s289, 1280, %s287, %s274, 640, 640, 40
        $region40: #{tpu_custom_call.1} parent=27 // pred_fallthru
          _
      $region28: #{tpu_custom_call.1} parent=5 // pred_fallthru
        _
      %p295 = scmp.le.s32.totalorder 2, %s15
      // Predicated region
      $region41: #{tpu_custom_call.1} parent=5 // pred_check
        %p296 = pneg %p295
      $region42: #{tpu_custom_call.1} parent=5 // pred_check_branch
        %298 = sbr.rel (%p296) target = $region44
      $region43: #{tpu_custom_call.1} parent=5 // pred_region
        %s299 = ssub.s32 %s15, 2
        // Predicated region
        $region45: #{tpu_custom_call.1} parent=43 // pred_check
          %p300 = pneg %p91
        $region46: #{tpu_custom_call.1} parent=43 // pred_check_branch
          %302 = sbr.rel (%p300) target = $region48
        $region47: #{tpu_custom_call.1} parent=43 // pred_region
          %s303 = sand.u32 %s76, 1
          %s304 = scalar_lea.sflag [#allocation4], %s303
          %s305 = sand.u32 %s76, 1
          %s306 = smul.addr %s305, 80
          %s307 = scalar_lea.vmem [#allocation7], %s306
          %308 = dma.done %s304, 1280
        $region48: #{tpu_custom_call.1} parent=43 // pred_fallthru
          _
      $region44: #{tpu_custom_call.1} parent=5 // pred_fallthru
        _
    $region6: #{tpu_custom_call.1} parent=1 // loop_footer
      %s19 = sadd.s32 1, %s15
    $region7: #{tpu_custom_call.1} parent=1 // loop_footer_branch
      %14 = sbr.rel target = $region3
    $region8: #{tpu_custom_call.1} parent=1 // loop_exit
      _
    %309 = vsyncpa [#allocation3], 1
    %s310 = scalar_lea.sflag [#allocation3], 1
    %311 = vsyncpa %s310, 1
    %312 = vsyncpa [#allocation6], 1
    %s313 = scalar_lea.sflag [#allocation6], 1
    %314 = vsyncpa %s313, 1
    %315 = vsyncpa [#allocation4], 1
    %s316 = scalar_lea.sflag [#allocation4], 1
    %317 = vsyncpa %s316, 1

</llo_original>
